<compile_context>
chip_gen: v6e
topology: v6e:2x2x1
jax: 0.10.0
libtpu: 0.0.40
codegen_flags: <defaults>
</compile_context>

<pallas_src>
import jax
import jax.numpy as jnp
from jax.experimental import pallas as pl
from jax.experimental.pallas import tpu as pltpu


def _channel_mask_kernel(x_ref, m_ref, o_ref):
    # x_ref / o_ref: (tr, thw) tile of the (N*C, H*W) view.
    # m_ref: (tr, 1) float32 mask slice for these rows (one value per (n, c)).
    x = x_ref[...]
    o_ref[...] = (x.astype(jnp.float32) * m_ref[...]).astype(o_ref.dtype)


def _block_target_bytes() -> int:
    """Per-generation block-byte target that fits the default scoped VMEM."""
    try:
        kind = jax.devices()[0].device_kind.lower()
    except Exception:
        kind = ""
    if "v6" in kind or "v7" in kind:
        # 4 MiB blocks: 2x(in) + 2x(out) + mask ≈ 18 MiB < 32 MiB default.
        return 4 * 1024 * 1024
    # v5e (16 MiB default scoped VMEM) and unknown chips: 2 MiB blocks.
    return 2 * 1024 * 1024


def _choose_tiles(rows: int, hw: int, itemsize: int, target_bytes: int):
    """Pick (row_tile, lane_tile) for the 2-D (N*C, H*W) view."""
    # Sublane packing multiple per dtype width (f32: 8, bf16: 16, int8/fp8: 32).
    sub = {4: 8, 2: 16, 1: 32}.get(itemsize, 8)
    # Lane (spatial) tile: full extent if it fits, else a 128-multiple cap;
    # ragged boundary blocks are handled by the cdiv grid.
    lane_cap = 8192
    thw = hw if hw <= lane_cap else lane_cap
    # Row tile: hit the block-byte target, stay sublane-aligned, and cap so
    # the lane-padded (tr, 1) mask block stays small (<= ~1 MiB per buffer).
    tr_target = max(sub, (target_bytes // max(1, thw * itemsize)) // sub * sub)
    tr = min(tr_target, 2048)
    if rows <= tr:
        tr = rows  # full extent is always a legal block dim
    return tr, thw


def channel_mask(x: jax.Array, mask: jax.Array) -> jax.Array:
    """Apply a per-channel mask to an NCHW input (ChannelMaskLayer.forward)."""
    N, C, H, W = x.shape
    assert mask.shape == (C,)
    hw = H * W
    rows = N * C
    itemsize = jnp.dtype(x.dtype).itemsize

    tr, thw = _choose_tiles(rows, hw, itemsize, _block_target_bytes())

    # Free (contiguous) reshape — no padding, no extra HBM pass.
    x2 = x.reshape(rows, hw)
    # Tiny per-row (= per (n, c)) float32 mask column; kept in f32 so the
    # multiply matches PyTorch promotion for sub-32-bit x dtypes.
    m2 = jnp.tile(mask.astype(jnp.float32), N).reshape(rows, 1)

    grid = (pl.cdiv(rows, tr), pl.cdiv(hw, thw))

    cost = pl.CostEstimate(
        flops=rows * hw,
        transcendentals=0,
        bytes_accessed=2 * rows * hw * itemsize + rows * 4,
    )

    out2 = pl.pallas_call(
        _channel_mask_kernel,
        out_shape=jax.ShapeDtypeStruct((rows, hw), x.dtype),
        grid_spec=pltpu.PrefetchScalarGridSpec(
            num_scalar_prefetch=0,
            grid=grid,
            in_specs=[
                # x: one (row-tile, lane-tile) block per step; boundary blocks
                # may be ragged (cdiv grid), Pallas masks the writeback.
                pl.BlockSpec((tr, thw), lambda ri, hi: (ri, hi)),
                # mask: small (tr, 1) block that follows the row tile.
                pl.BlockSpec((tr, 1), lambda ri, hi: (ri, 0)),
            ],
            out_specs=pl.BlockSpec((tr, thw), lambda ri, hi: (ri, hi)),
        ),
        compiler_params=pltpu.CompilerParams(
            # Both axes independent -> shard across both v7x TensorCores.
            dimension_semantics=("parallel", "parallel"),
        ),
        cost_estimate=cost,
    )(x2, m2)

    return out2.reshape(N, C, H, W)


if __name__ == "__main__":
    key = jax.random.PRNGKey(0)
    kx, km = jax.random.split(key)

    N, C, H, W = 2, 4, 16, 16
    x = jax.random.normal(kx, (N, C, H, W), dtype=jnp.float32)
    # Deterministic synthetic mask in [0, 1] (what ACoSP would learn/anneal).
    mask = jax.random.uniform(km, (C,), dtype=jnp.float32)

    y = channel_mask(x, mask)
    jax.block_until_ready(y)

    # Reference check against plain-JAX broadcast (same semantics as PyTorch).
    y_ref = x * mask[None, :, None, None]
    assert y.shape == y_ref.shape
    assert jnp.allclose(y, y_ref, atol=1e-6), "mismatch vs reference"

    print("KERNEL_OK")
</pallas_src>

<mosaic_0001>
module attributes {stable_mosaic.version = 11 : i64} {
  func.func @_channel_mask_kernel(%arg0: i32, %arg1: i32, %arg2: memref<8x256xf32, #tpu.memory_space<vmem>>, %arg3: memref<8x1xf32, #tpu.memory_space<vmem>>, %arg4: memref<8x256xf32, #tpu.memory_space<vmem>>) attributes {dimension_semantics = [#tpu.dimension_semantics<parallel>, #tpu.dimension_semantics<parallel>], iteration_bounds = array<i64: 1, 1>, scalar_prefetch = 0 : i64, scratch_operands = 0 : i64, tpu.core_type = #tpu.core_type<tc>, window_params = [{transform_indices = @transform_0, window_bounds = array<i64: 8, 256>}, {transform_indices = @transform_1, window_bounds = array<i64: 8, 1>}, {transform_indices = @transform_2, window_bounds = array<i64: 8, 256>}]} {
    %c0 = arith.constant 0 : index
    %c0_0 = arith.constant 0 : index
    %0 = vector.load %arg2[%c0, %c0_0] : memref<8x256xf32, #tpu.memory_space<vmem>>, vector<8x256xf32>
    %c0_1 = arith.constant 0 : index
    %c0_2 = arith.constant 0 : index
    %1 = vector.load %arg3[%c0_1, %c0_2] : memref<8x1xf32, #tpu.memory_space<vmem>>, vector<8x1xf32>
    %2 = vector.broadcast %1 : vector<8x1xf32> to vector<8x256xf32>
    %3 = arith.mulf %0, %2 : vector<8x256xf32>
    %c0_3 = arith.constant 0 : index
    %c0_4 = arith.constant 0 : index
    %4 = vector.load %arg4[%c0_3, %c0_4] : memref<8x256xf32, #tpu.memory_space<vmem>>, vector<8x256xf32>
    tpu.vector_store %arg4[%c0_3, %c0_4], %3 {strides = array<i32>} : memref<8x256xf32, #tpu.memory_space<vmem>>, vector<8x256xf32>,
    return
  }
  func.func @transform_0(%arg0: i32, %arg1: i32) -> (i32, i32) {
    %c0_i32 = arith.constant 0 : i32
    return %arg0, %arg1 : i32, i32
  }
  func.func @transform_1(%arg0: i32, %arg1: i32) -> (i32, i32) {
    %c0_i32 = arith.constant 0 : i32
    %c0_i32_0 = arith.constant 0 : i32
    return %arg0, %c0_i32 : i32, i32
  }
  func.func @transform_2(%arg0: i32, %arg1: i32) -> (i32, i32) {
    %c0_i32 = arith.constant 0 : i32
    return %arg0, %arg1 : i32, i32
  }
}

</mosaic_0001>

<llo_original>
// kernel: tpu_custom_call.1
$region0: #{tpu_custom_call.1}
  #allocation0 [shape = 'u32[]', space=smem, size = 0x4, offset = 0x4, fixed_abs, tag = 'smem constant byte address 0x4 - core index']
  #allocation1 [shape = 'u32[144,128]{1,0:T(1,128)}', space=vmem, size = 0x12000, scoped, tag = 'internal scratch']
  %s0 = inlined_call_operand.hbm [shape: f32[8,256], index: 0, kind: input, shape index: {}]
  %s1 = inlined_call_operand.vmem [shape: f32[8,1], index: 1, kind: input, shape index: {}]
  %s2 = inlined_call_operand.hbm [shape: f32[8,256], index: 2, kind: output, shape index: {}]
  %s3 = sld [smem:[#allocation0]]
  $region22: #{tpu_custom_call.1} parent=0
    _
  %s5 = ssub.s32 1, %s3
  %s6 = scalar_select 0, %s5, %s3
  $region1: #{tpu_custom_call.1} parent=0
    #allocation2 [shape = 'u8[8192]{0}', space=vmem, size = 0x2000, scoped, tag = 'input window, operand 0, single buffered']
    #allocation3 [shape = 's32[1]{0}', space=sflag, size = 0x4, scoped, tag = 'scoped memory for tpu_custom_call.1']
    #allocation4 [shape = 's32[1]{0}', space=sflag, size = 0x4, scoped, tag = 'scoped memory for tpu_custom_call.1']
    #allocation5 [shape = 'u8[8192]{0}', space=vmem, size = 0x2000, scoped, tag = 'output window, operand 0, single buffered']
    %7 = vsyncpa [#allocation3], 0
    %8 = vsyncpa [#allocation4], 0
    // Predicated region
    $region2: #{tpu_custom_call.1} parent=1 // pred_check
      _
    $region3: #{tpu_custom_call.1} parent=1 // pred_check_branch
      %10 = sbr.rel (0) target = $region5
    $region4: #{tpu_custom_call.1} parent=1 // pred_region
      %s12 = ssub.s32 256, 256
      %13 = vsyncadd [#allocation3], %s12
      %s15 = sshll.u32 [#allocation2], 4
      %s16 = int_to_ptr.vmem [resolvable:$true] %s15
      %18 = dma.hbm_to_vmem [thread:$0]  %s0, 256, %s16, [#allocation3]
    $region5: #{tpu_custom_call.1} parent=1 // pred_fallthru
      _
    // Predicated region
    $region6: #{tpu_custom_call.1} parent=1 // pred_check
      _
    $region7: #{tpu_custom_call.1} parent=1 // pred_check_branch
      %20 = sbr.rel (0) target = $region9
    $region8: #{tpu_custom_call.1} parent=1 // pred_region
      _
    $region9: #{tpu_custom_call.1} parent=1 // pred_fallthru
      _
    // Predicated region
    $region10: #{tpu_custom_call.1} parent=1 // pred_check
      _
    $region11: #{tpu_custom_call.1} parent=1 // pred_check_branch
      %22 = sbr.rel (0) target = $region13
    $region12: #{tpu_custom_call.1} parent=1 // pred_region
      %23 = dma.done [#allocation3], 256
    $region13: #{tpu_custom_call.1} parent=1 // pred_fallthru
      _
    %v24 = vld [vmem:[#allocation2] sm:$0xff]
    %v25 = vld [vmem:[#allocation2 + $0x8] sm:$0xff]
    %v26 = vld [vmem:[%s1] sm:$0xff]
    %28 = vset.pattern.permute.xlu0 0
    %29 = vperm.xlu0 %28, %v26
    %v30 = vpop.permute.xlu0 %29
    %v32 = vmul.f32 %v24, %v30
    %v33 = vmul.f32 %v25, %v30
    %34 = vst [vmem:[#allocation5] sm:$0xff] %v32
    %35 = vst [vmem:[#allocation5 + $0x8] sm:$0xff] %v33
    // Predicated region
    $region14: #{tpu_custom_call.1} parent=1 // pred_check
      _
    $region15: #{tpu_custom_call.1} parent=1 // pred_check_branch
      %37 = sbr.rel (0) target = $region17
    $region16: #{tpu_custom_call.1} parent=1 // pred_region
      %s39 = ssub.s32 256, 256
      %40 = vsyncadd [#allocation4], %s39
      %s42 = sshll.u32 [#allocation5], 4
      %s43 = int_to_ptr.vmem [resolvable:$true] %s42
      %45 = dma.vmem_to_hbm [thread:$0]  %s43, 256, %s2, [#allocation4]
    $region17: #{tpu_custom_call.1} parent=1 // pred_fallthru
      _
    // Predicated region
    $region18: #{tpu_custom_call.1} parent=1 // pred_check
      _
    $region19: #{tpu_custom_call.1} parent=1 // pred_check_branch
      %47 = sbr.rel (0) target = $region21
    $region20: #{tpu_custom_call.1} parent=1 // pred_region
      %48 = dma.done [#allocation4], 256
    $region21: #{tpu_custom_call.1} parent=1 // pred_fallthru
      _
    %49 = vsyncpa [#allocation3], 1
    %50 = vsyncpa [#allocation4], 1

</llo_original>
